<compile_context>
chip_gen: v7x
topology: tpu7x:2x2x1
jax: 0.10.0
libtpu: 0.0.40
codegen_flags: <defaults>
</compile_context>

<pallas_src>
import functools
import math

import jax
import jax.numpy as jnp
from jax.experimental import pallas as pl
from jax.experimental.pallas import tpu as pltpu


def _round_up(v, mult):
    return ((v + mult - 1) // mult) * mult


def _cdiv(a, b):
    return (a + b - 1) // b


@functools.lru_cache(maxsize=1)
def _tpu_vmem_info():
    """Returns (vmem_capacity, planning_budget, scoped_limit, small_vmem_part)."""
    vmem = None
    try:
        vmem = int(pltpu.get_tpu_info().vmem_capacity_bytes)
    except Exception:
        vmem = None
    if not vmem or vmem <= 0:
        vmem = 64 * 1024 * 1024          # conservative fallback: v7x-sized VMEM
    budget = int(vmem * 0.70)            # tile-planning budget
    limit = max(min(int(vmem * 0.80), vmem - (4 << 20)), 32 << 20)
    # ~64 MiB per TensorCore => v7x-like (2 TCs/chip); 128 MiB => v5e/v6e.
    small_vmem = vmem <= 96 * 1024 * 1024
    return vmem, budget, limit, small_vmem


# ----------------------------- kernels --------------------------------------


def _full_k_kernel(x_ref, w_ref, o_ref):
    # Single MXU pass over the whole K for this (tm, tn) output block.
    # x_ref: (tm, K), w_ref: (K, tn) -- plain matmul, no in-kernel transpose.
    o_ref[...] = jnp.dot(
        x_ref[...], w_ref[...], preferred_element_type=jnp.float32
    ).astype(o_ref.dtype)


def _k_tiled_f32_kernel(x_ref, w_ref, o_ref):
    # Output block index is constant along the K grid axis, so o_ref stays
    # VMEM-resident: accumulate into it directly (f32 output, no scratch).
    @pl.when(pl.program_id(2) == 0)
    def _():
        o_ref[...] = jnp.zeros_like(o_ref)

    o_ref[...] += jnp.dot(x_ref[...], w_ref[...],
                          preferred_element_type=jnp.float32)


def _k_tiled_acc_kernel(x_ref, w_ref, o_ref, acc_ref):
    # Narrow output dtype: accumulate in an f32 scratch, cast once at the end.
    @pl.when(pl.program_id(2) == 0)
    def _():
        acc_ref[...] = jnp.zeros_like(acc_ref)

    acc_ref[...] += jnp.dot(x_ref[...], w_ref[...],
                            preferred_element_type=jnp.float32)

    @pl.when(pl.program_id(2) == pl.num_programs(2) - 1)
    def _():
        o_ref[...] = acc_ref[...].astype(o_ref.dtype)


# ----------------------------- wrapper ---------------------------------------


def _path_a_vmem_bytes(tm, tn, k, xb, wb, ob):
    # Double-buffered x / W^T / out tiles; pad K to lane / sublane grain for
    # a conservative layout-aware estimate.
    k_lane = _round_up(k, 128)     # K is the lane dim of the x tile
    k_sub = _round_up(k, 8)        # K is the sublane dim of the W^T tile
    return 2 * tm * k_lane * xb + 2 * k_sub * tn * wb + 2 * tm * tn * ob


@functools.partial(jax.jit, static_argnames=("compute_dtype",))
def feature_adaptor_forward(x, weight, *, compute_dtype=None):
    """Pallas equivalent of FeatureAdaptor.forward: y = x @ weight.T (no bias).

    compute_dtype: optional narrower MXU operand dtype (e.g. jnp.bfloat16);
    accumulation stays f32 and the output keeps x.dtype. Default None keeps
    the module's f32 numerics.
    """
    *lead, k = x.shape
    n, k_w = weight.shape
    if k != k_w:
        raise ValueError(f"feature dim mismatch: {k} vs {k_w}")
    out_dtype = x.dtype

    m = math.prod(lead) if lead else 1
    x2d = x.reshape(m, k)
    w_t = weight.T                               # one-time [K, N] layout; no
    if compute_dtype is not None:                # per-step transpose in-kernel
        x2d = x2d.astype(compute_dtype)
        w_t = w_t.astype(compute_dtype)

    xb = x2d.dtype.itemsize
    wb = w_t.dtype.itemsize
    ob = jnp.dtype(out_dtype).itemsize

    _, budget, vmem_limit, small_vmem = _tpu_vmem_info()

    # --- Balanced M tiles (~512 rows): amortize per-grid-step overhead without
    # padding a nearly-empty final tile; the ragged last block is masked.
    n_m_tiles = max(1, _cdiv(m, 512))
    tm = _round_up(_cdiv(m, n_m_tiles), 8)

    # --- N tiling: lane-dense (multiple of 128). Prefer the whole padded
    # weight resident in VMEM; otherwise 256-multiples before 128.
    n_full = _round_up(n, 128)

    def fits(tn_):
        return _path_a_vmem_bytes(tm, tn_, k, xb, wb, ob) <= budget

    use_full_k = False
    tn = n_full
    if fits(n_full):
        use_full_k = True
    else:
        for cand in (512, 256, 128):
            tn_c = min(cand, n_full)
            if fits(tn_c):
                tn = tn_c
                use_full_k = True
                break

    cost = pl.CostEstimate(
        flops=2 * m * n * k,
        transcendentals=0,
        bytes_accessed=m * k * xb + n * k * wb + m * n * ob,
    )

    if use_full_k:
        # ---------------- Path A: whole K per block, no reduction axis ------
        n_pad = _round_up(n, tn)
        grid_m = _cdiv(m, tm)
        grid_n = n_pad // tn

        # v7x-like parts have 2 TensorCores: avoid a (1,1) grid for mid-size M
        # so both cores get a "parallel" step. (1-TC parts keep the 1-step grid.)
        if small_vmem and grid_m * grid_n == 1 and m >= 256:
            tm = _round_up(_cdiv(m, 2), 8)
            grid_m = _cdiv(m, tm)

        w_p = w_t if n_pad == n else jnp.pad(w_t, ((0, 0), (0, n_pad - n)))

        vmem_need = _path_a_vmem_bytes(tm, tn, k, xb, wb, ob)
        y_pad = pl.pallas_call(
            _full_k_kernel,
            out_shape=jax.ShapeDtypeStruct((m, n_pad), out_dtype),
            grid_spec=pltpu.PrefetchScalarGridSpec(
                num_scalar_prefetch=0,
                grid=(grid_m, grid_n),
                in_specs=[
                    pl.BlockSpec((tm, k), lambda i, j: (i, 0)),   # x tile
                    pl.BlockSpec((k, tn), lambda i, j: (0, j)),   # W^T [K, N]
                ],
                out_specs=pl.BlockSpec((tm, tn), lambda i, j: (i, j)),
            ),
            compiler_params=pltpu.CompilerParams(
                dimension_semantics=("parallel", "parallel"),
                vmem_limit_bytes=min(vmem_limit,
                                     max(vmem_need + (4 << 20), 32 << 20)),
            ),
            cost_estimate=cost,
        )(x2d, w_p)
    else:
        # ---------------- Path B: K too large to keep resident --------------
        # kk innermost ("arbitrary"); output block stays VMEM-resident across
        # the reduction. K MUST be zero-padded here: ragged/garbage K lanes
        # would corrupt the accumulation.
        tn = 256 if n_full >= 256 else n_full
        tk = 512
        while tk > 128 and 2 * tk * tn * wb > budget // 3:
            tk //= 2
        k_pad = _round_up(k, tk)
        n_pad = _round_up(n, tn)

        f32_out = jnp.dtype(out_dtype) == jnp.dtype(jnp.float32)
        # Budget-driven tm (bigger tm => fewer W re-reads from HBM), balanced.
        per_row = 2 * tk * xb + 2 * tn * ob + (0 if f32_out else tn * 4)
        tm_max = (budget - 2 * tk * tn * wb) // per_row
        tm_max = max(8, min(2048, (tm_max // 8) * 8))
        n_m_tiles = max(1, _cdiv(m, tm_max))
        tm = _round_up(_cdiv(m, n_m_tiles), 8)

        x_p = x2d if k_pad == k else jnp.pad(x2d, ((0, 0), (0, k_pad - k)))
        w_p = jnp.pad(w_t, ((0, k_pad - k), (0, n_pad - n)))

        grid = (_cdiv(m, tm), n_pad // tn, k_pad // tk)
        kernel = _k_tiled_f32_kernel if f32_out else _k_tiled_acc_kernel
        scratch = [] if f32_out else [pltpu.VMEM((tm, tn), jnp.float32)]

        y_pad = pl.pallas_call(
            kernel,
            out_shape=jax.ShapeDtypeStruct((m, n_pad), out_dtype),
            grid_spec=pltpu.PrefetchScalarGridSpec(
                num_scalar_prefetch=0,
                grid=grid,
                in_specs=[
                    pl.BlockSpec((tm, tk), lambda i, j, kk: (i, kk)),
                    pl.BlockSpec((tk, tn), lambda i, j, kk: (kk, j)),
                ],
                out_specs=pl.BlockSpec((tm, tn), lambda i, j, kk: (i, j)),
                scratch_shapes=scratch,
            ),
            compiler_params=pltpu.CompilerParams(
                dimension_semantics=("parallel", "parallel", "arbitrary"),
                vmem_limit_bytes=vmem_limit,
            ),
            cost_estimate=cost,
        )(x_p, w_p)

    y2d = y_pad if n_pad == n else y_pad[:, :n]
    return y2d.reshape(*lead, n)


if __name__ == "__main__":
    key = jax.random.PRNGKey(0)
    kx, kw, kx2, kw2 = jax.random.split(key, 4)

    # --- Small shapes consistent with the module: batch=2, seq=8, 32 -> 64 ---
    batch, seq, input_size, output_size = 2, 8, 32, 64
    x = jax.random.normal(kx, (batch, seq, input_size), dtype=jnp.float32)
    bound = 1.0 / jnp.sqrt(input_size)           # nn.Linear weight: (out, in)
    weight = jax.random.uniform(
        kw, (output_size, input_size), dtype=jnp.float32,
        minval=-bound, maxval=bound,
    )

    y = feature_adaptor_forward(x, weight)
    jax.block_until_ready(y)
    y_ref = jnp.einsum("bsk,nk->bsn", x, weight)
    assert y.shape == (batch, seq, output_size)
    assert jnp.allclose(y, y_ref, atol=1e-5, rtol=1e-5)

    # --- Second case: ragged M (600 rows, balanced 2x304 tiles) + N padding ---
    b2, s2, in2, out2 = 3, 200, 256, 320
    x2 = jax.random.normal(kx2, (b2, s2, in2), dtype=jnp.float32)
    w2 = jax.random.uniform(
        kw2, (out2, in2), dtype=jnp.float32,
        minval=-1.0 / jnp.sqrt(in2), maxval=1.0 / jnp.sqrt(in2),
    )
    y2 = feature_adaptor_forward(x2, w2)
    jax.block_until_ready(y2)
    y2_ref = jnp.einsum("bsk,nk->bsn", x2, w2)
    assert y2.shape == (b2, s2, out2)
    assert jnp.allclose(y2, y2_ref, atol=1e-4, rtol=1e-4)

    print("KERNEL_OK")
</pallas_src>

<mosaic_0001>
module attributes {stable_mosaic.version = 11 : i64} {
  func.func @_full_k_kernel(%arg0: i32, %arg1: i32, %arg2: memref<16x32xf32, #tpu.memory_space<vmem>>, %arg3: memref<32x128xf32, #tpu.memory_space<vmem>>, %arg4: memref<16x128xf32, #tpu.memory_space<vmem>>) attributes {dimension_semantics = [#tpu.dimension_semantics<parallel>, #tpu.dimension_semantics<parallel>], iteration_bounds = array<i64: 1, 1>, scalar_prefetch = 0 : i64, scratch_operands = 0 : i64, tpu.core_type = #tpu.core_type<tc>, window_params = [{transform_indices = @transform_0, window_bounds = array<i64: 16, 32>}, {transform_indices = @transform_1, window_bounds = array<i64: 32, 128>}, {transform_indices = @transform_2, window_bounds = array<i64: 16, 128>}]} {
    %c0 = arith.constant 0 : index
    %c0_0 = arith.constant 0 : index
    %0 = vector.load %arg2[%c0, %c0_0] : memref<16x32xf32, #tpu.memory_space<vmem>>, vector<16x32xf32>
    %c0_1 = arith.constant 0 : index
    %c0_2 = arith.constant 0 : index
    %1 = vector.load %arg3[%c0_1, %c0_2] : memref<32x128xf32, #tpu.memory_space<vmem>>, vector<32x128xf32>
    %cst = arith.constant dense<0.000000e+00> : vector<16x128xf32>
    %2 = tpu.matmul %0, %1, %cst {dimension_numbers = #tpu.dot_dimension_numbers<[1], [0], [0], [1], [0, 0, 1, 1], [], []>} : vector<16x32xf32>, vector<32x128xf32>, vector<16x128xf32> -> vector<16x128xf32>
    %c0_3 = arith.constant 0 : index
    %c0_4 = arith.constant 0 : index
    %3 = vector.load %arg4[%c0_3, %c0_4] : memref<16x128xf32, #tpu.memory_space<vmem>>, vector<16x128xf32>
    tpu.vector_store %arg4[%c0_3, %c0_4], %2 {strides = array<i32>} : memref<16x128xf32, #tpu.memory_space<vmem>>, vector<16x128xf32>,
    return
  }
  func.func @transform_0(%arg0: i32, %arg1: i32) -> (i32, i32) {
    %c0_i32 = arith.constant 0 : i32
    %c0_i32_0 = arith.constant 0 : i32
    return %arg0, %c0_i32 : i32, i32
  }
  func.func @transform_1(%arg0: i32, %arg1: i32) -> (i32, i32) {
    %c0_i32 = arith.constant 0 : i32
    %c0_i32_0 = arith.constant 0 : i32
    return %c0_i32, %arg1 : i32, i32
  }
  func.func @transform_2(%arg0: i32, %arg1: i32) -> (i32, i32) {
    %c0_i32 = arith.constant 0 : i32
    return %arg0, %arg1 : i32, i32
  }
}

</mosaic_0001>

<llo_original>
// kernel: feature_adaptor_forward.1
$region0: #{feature_adaptor_forward.1}
  #allocation0 [shape = 'u32[]', space=smem, size = 0x4, offset = 0x4, fixed_abs, tag = 'smem constant byte address 0x4 - core index']
  #allocation1 [shape = 'u32[144,128]{1,0:T(1,128)}', space=vmem, size = 0x12000, scoped, tag = 'internal scratch']
  %s0 = inlined_call_operand.vmem [shape: f32[16,32], index: 0, kind: input, shape index: {}]
  %s1 = inlined_call_operand.vmem [shape: f32[32,128], index: 1, kind: input, shape index: {}]
  %s2 = inlined_call_operand.vmem [shape: f32[16,128], index: 2, kind: output, shape index: {}]
  %s3 = sld [smem:[#allocation0]]
  $region18: #{feature_adaptor_forward.1} parent=0
    _
  %s5 = ssub.s32 1, %s3
  %s6 = scalar_select 0, %s5, %s3
  // Predicated region
  $region2: #{feature_adaptor_forward.1} parent=0 // pred_check
    _
  $region3: #{feature_adaptor_forward.1} parent=0 // pred_check_branch
    %8 = sbr.rel (0) target = $region5
  $region4: #{feature_adaptor_forward.1} parent=0 // pred_region
    _
  $region5: #{feature_adaptor_forward.1} parent=0 // pred_fallthru
    _
  // Predicated region
  $region6: #{feature_adaptor_forward.1} parent=0 // pred_check
    _
  $region7: #{feature_adaptor_forward.1} parent=0 // pred_check_branch
    %10 = sbr.rel (0) target = $region9
  $region8: #{feature_adaptor_forward.1} parent=0 // pred_region
    _
  $region9: #{feature_adaptor_forward.1} parent=0 // pred_fallthru
    _
  %v11 = vld [vmem:[%s0] sm:$0xff]
  %v12 = vld [vmem:[%s0 + $0x8] sm:$0xff]
  %v13 = vld [vmem:[%s1] sm:$0xff]
  %v14 = vld [vmem:[%s1 + $0x8] sm:$0xff]
  %v15 = vld [vmem:[%s1 + $0x10] sm:$0xff]
  %v16 = vld [vmem:[%s1 + $0x18] sm:$0xff]
  %vm17 = vcmask 261120
  %v19 = vsel %vm17, %v11, 0
  %v22 = vsel %vm17, %v12, 0
  %24 = vmatprep.subr.mxu0 0.0
  %25 = vmatpush1.msra.mxu0 %v13
  %26 = vmatprep.subr.mxu0 0.0
  %27 = vmatpush1.msra.mxu0 %v14
  %28 = vmatprep.subr.mxu0 0.0
  %29 = vmatpush1.msra.mxu0 %v15
  %30 = vmatprep.subr.mxu0 0.0
  %31 = vmatpush1.msra.mxu0 %v16
  %32 = vmatprep.subr.mxu0 0.0
  %33 = vmatpush1.msra.mxu0 0.0
  %34 = vmatprep.subr.mxu0 0.0
  %35 = vmatpush1.msra.mxu0 0.0
  %36 = vmatprep.subr.mxu0 0.0
  %37 = vmatpush1.msra.mxu0 0.0
  %38 = vmatprep.subr.mxu0 0.0
  %39 = vmatpush1.msra.mxu0 0.0
  %40 = vmatprep.subr.mxu0 0.0
  %41 = vmatpush1.msra.mxu0 0.0
  %42 = vmatprep.subr.mxu0 0.0
  %43 = vmatpush1.msra.mxu0 0.0
  %44 = vmatprep.subr.mxu0 0.0
  %45 = vmatpush1.msra.mxu0 0.0
  %46 = vmatprep.subr.mxu0 0.0
  %47 = vmatpush1.msra.mxu0 0.0
  %48 = vmatprep.subr.mxu0 0.0
  %49 = vmatpush1.msra.mxu0 0.0
  %50 = vmatprep.subr.mxu0 0.0
  %51 = vmatpush1.msra.mxu0 0.0
  %52 = vmatprep.subr.mxu0 0.0
  %53 = vmatpush1.msra.mxu0 0.0
  %54 = vmatprep.subr.mxu0 0.0
  %55 = vmatpush1.msra.mxu0 0.0
  %56 = vmatprep.subr.mxu0 0.0
  %57 = vmatpush1.msra.mxu0 0.0
  %58 = vmatprep.subr.mxu0 0.0
  %59 = vmatpush1.msra.mxu0 0.0
  %60 = vmatprep.subr.mxu0 0.0
  %61 = vmatpush1.msra.mxu0 0.0
  %62 = vmatprep.subr.mxu0 0.0
  %63 = vmatpush1.msra.mxu0 0.0
  %64 = vmatprep.subr.mxu0 0.0
  %65 = vmatpush1.msra.mxu0 0.0
  %66 = vmatprep.subr.mxu0 0.0
  %67 = vmatpush1.msra.mxu0 0.0
  %68 = vmatprep.subr.mxu0 0.0
  %69 = vmatpush1.msra.mxu0 0.0
  %70 = vmatprep.subr.mxu0 0.0
  %71 = vmatpush1.msra.mxu0 0.0
  %72 = vmatprep.subr.mxu0 0.0
  %73 = vmatpush1.msra.mxu0 0.0
  %74 = vmatprep.subr.mxu0 0.0
  %75 = vmatpush1.msra.mxu0 0.0
  %76 = vmatprep.subr.mxu0 0.0
  %77 = vmatpush1.msra.mxu0 0.0
  %78 = vmatprep.subr.mxu0 0.0
  %79 = vmatpush1.msra.mxu0 0.0
  %80 = vmatprep.subr.mxu0 0.0
  %81 = vmatpush1.msra.mxu0 0.0
  %82 = vmatprep.subr.mxu0 0.0
  %83 = vmatpush1.msra.mxu0 0.0
  %84 = vmatprep.subr.mxu0 0.0
  %85 = vmatpush1.msra.mxu0 0.0
  %86 = vmatprep.subr.mxu0 0.0
  %87 = vmatpush1.msra.mxu0 0.0
  %88 = vmatprep.mubr.f32.mxu0 0.0
  %89 = vmatmul.mubr.f32.gmra.mrb[0].mxu0 %v19
  %v90 = vpop.f32.mrb[0].mxu0
  %v91 = vadd.f32 0.0, %v90
  %v92 = vpop.f32.mrb[0].mxu0
  %93 = vmatprep.mubr.f32.mxu0 0.0
  %94 = vmatmul.mubr.f32.gmra.mrb[0].mxu0 %v22
  %v95 = vpop.f32.mrb[0].mxu0
  %v96 = vadd.f32 0.0, %v95
  %v97 = vpop.f32.mrb[0].mxu0
  %98 = vdwg.mxu0
  %99 = vst [vmem:[%s2] sm:$0xff] %v91
  %100 = vst [vmem:[%s2 + $0x8] sm:$0xff] %v96
  // Predicated region
  $region10: #{feature_adaptor_forward.1} parent=0 // pred_check
    _
  $region11: #{feature_adaptor_forward.1} parent=0 // pred_check_branch
    %102 = sbr.rel (0) target = $region13
  $region12: #{feature_adaptor_forward.1} parent=0 // pred_region
    _
  $region13: #{feature_adaptor_forward.1} parent=0 // pred_fallthru
    _
  // Predicated region
  $region14: #{feature_adaptor_forward.1} parent=0 // pred_check
    _
  $region15: #{feature_adaptor_forward.1} parent=0 // pred_check_branch
    %104 = sbr.rel (0) target = $region17
  $region16: #{feature_adaptor_forward.1} parent=0 // pred_region
    _
  $region17: #{feature_adaptor_forward.1} parent=0 // pred_fallthru
    _

</llo_original>
